<compile_context>
chip_gen: v7x
topology: tpu7x:2x2x1
jax: 0.10.0
libtpu: 0.0.40
codegen_flags: <defaults>
</compile_context>

<pallas_src>
import functools
import itertools
from math import ceil

import jax
import jax.numpy as jnp
from jax.experimental import pallas as pl
from jax.experimental.pallas import tpu as pltpu


# ---------------------------------------------------------------------------
# Static relation-set construction (mirrors RelationModuleMultiScale.__init__
# and the even-subsampling done in forward()).
# ---------------------------------------------------------------------------
def _build_relation_config(num_frames, subsample_num=3):
    scales = list(range(num_frames, 1, -1))
    selected = []
    for sidx, scale in enumerate(scales):
        relations = list(itertools.combinations(range(num_frames), scale))
        if sidx == 0:
            chosen = [relations[0]]                      # single full-frame relation
        else:
            ntot = len(relations)
            nsel = min(subsample_num, ntot)
            idxs = [int(ceil(i * ntot / nsel)) for i in range(nsel)]
            chosen = [relations[i] for i in idxs]
        selected.append(chosen)
    return scales, selected


# ---------------------------------------------------------------------------
# Pallas kernel: one temporal scale per grid step
# ---------------------------------------------------------------------------
def _relation_fusion_kernel(nvalid_ref, x_ref, w_ref, b_ref, o_ref, *,
                            num_rel, batch):
    # nvalid_ref: SMEM (num_scales,) int32  -- #valid relation slots for scale s
    # x_ref     : (1, R*B, Kmax)  raw gathered frames (zero padded)
    # w_ref     : (1, Kmax, NB)   per-scale weight (zero-padded K rows)
    # b_ref     : (1, 1, NB)
    # o_ref     : (1, B, NB)
    s = pl.program_id(0)
    x = jnp.maximum(x_ref[0], 0.0)                                    # inner ReLU (VPU)
    y = jnp.dot(x, w_ref[0], preferred_element_type=jnp.float32)      # single MXU matmul
    y = jnp.maximum(y + b_ref[0], 0.0)                                # bias + outer ReLU

    acc = jnp.zeros((batch, y.shape[-1]), jnp.float32)
    for r in range(num_rel):                                          # static, tiny
        valid = (r < nvalid_ref[s]).astype(jnp.float32)               # mask padded slots
        acc = acc + y[r * batch:(r + 1) * batch, :] * valid
    o_ref[0] = acc.astype(o_ref.dtype)


# ---------------------------------------------------------------------------
# Forward wrapper (Pallas path)
# ---------------------------------------------------------------------------
def relation_module_multiscale_forward(x, weights, biases, *, num_frames,
                                       img_feature_dim, num_bottleneck,
                                       subsample_num=3):
    B, T, D = x.shape
    assert T == num_frames and D == img_feature_dim and T >= 2
    NB = num_bottleneck
    scales, selected = _build_relation_config(num_frames, subsample_num)
    num_scales = len(scales)
    R = max(len(c) for c in selected)
    Kmax = num_frames * D

    # ---- static gather / flatten / zero-pad (index shuffling only) ----
    x_rows = []
    for sidx, scale in enumerate(scales):
        slots = []
        for r in range(R):
            if r < len(selected[sidx]):
                frames = jnp.asarray(selected[sidx][r], dtype=jnp.int32)
                g = jnp.take(x, frames, axis=1).reshape(B, scale * D)
                g = jnp.pad(g, ((0, 0), (0, Kmax - scale * D)))
            else:
                g = jnp.zeros((B, Kmax), x.dtype)
            slots.append(g)
        x_rows.append(jnp.concatenate(slots, axis=0))                 # (R*B, Kmax)
    x_pack = jnp.stack(x_rows, axis=0).astype(jnp.float32)            # (S, R*B, Kmax)

    w_pack = jnp.stack(
        [jnp.pad(weights[i], ((0, Kmax - scales[i] * D), (0, 0)))
         for i in range(num_scales)], axis=0).astype(jnp.float32)     # (S, Kmax, NB)
    b_pack = jnp.stack([biases[i].reshape(1, NB) for i in range(num_scales)],
                       axis=0).astype(jnp.float32)                    # (S, 1, NB)
    nvalid = jnp.asarray([len(c) for c in selected], dtype=jnp.int32)  # (S,)

    kern = functools.partial(_relation_fusion_kernel, num_rel=R, batch=B)
    out = pl.pallas_call(
        kern,
        out_shape=jax.ShapeDtypeStruct((num_scales, B, NB), jnp.float32),
        grid_spec=pltpu.PrefetchScalarGridSpec(
            num_scalar_prefetch=1,
            grid=(num_scales,),
            in_specs=[
                pl.BlockSpec((1, R * B, Kmax), lambda s, nv: (s, 0, 0)),
                pl.BlockSpec((1, Kmax, NB), lambda s, nv: (s, 0, 0)),
                pl.BlockSpec((1, 1, NB), lambda s, nv: (s, 0, 0)),
            ],
            out_specs=pl.BlockSpec((1, B, NB), lambda s, nv: (s, 0, 0)),
        ),
        compiler_params=pltpu.CompilerParams(
            dimension_semantics=("parallel",),
        ),
    )(nvalid, x_pack, w_pack, b_pack)

    return jnp.transpose(out, (1, 0, 2))                              # (B, S, NB)


# ---------------------------------------------------------------------------
# Pure-JAX (XLA) reference mirroring the PyTorch forward, for cross-check
# ---------------------------------------------------------------------------
def relation_module_multiscale_reference(x, weights, biases, *, num_frames,
                                         img_feature_dim, num_bottleneck,
                                         subsample_num=3):
    B = x.shape[0]
    D = img_feature_dim
    scales, selected = _build_relation_config(num_frames, subsample_num)
    outs = []
    for sidx, scale in enumerate(scales):
        tot = jnp.zeros((B, num_bottleneck), jnp.float32)
        for frames in selected[sidx]:
            a = jnp.take(x, jnp.asarray(frames, dtype=jnp.int32), axis=1)
            a = a.reshape(B, scale * D)
            a = jnp.maximum(a, 0.0)
            a = jnp.dot(a, weights[sidx],
                        precision=jax.lax.Precision.HIGHEST) + biases[sidx]
            a = jnp.maximum(a, 0.0)
            tot = tot + a
        outs.append(tot)
    return jnp.stack(outs, axis=1)


# ---------------------------------------------------------------------------
# Deterministic parameter init (one Linear(scale*D -> NB) per scale)
# ---------------------------------------------------------------------------
def init_params(key, num_frames, img_feature_dim, num_bottleneck):
    scales = list(range(num_frames, 1, -1))
    weights, biases = [], []
    for scale in scales:
        key, kw, kb = jax.random.split(key, 3)
        fan_in = scale * img_feature_dim
        w = jax.random.normal(kw, (fan_in, num_bottleneck),
                              jnp.float32) * (1.0 / fan_in) ** 0.5
        b = jax.random.normal(kb, (num_bottleneck,), jnp.float32) * 0.01
        weights.append(w)
        biases.append(b)
    return weights, biases


# ---------------------------------------------------------------------------
if __name__ == "__main__":
    # batch=8 (fills sublanes), num_frames=5, img_feature_dim=128, bottleneck=256
    B, T, D, NB = 8, 5, 128, 256
    key = jax.random.PRNGKey(0)
    kx, kp = jax.random.split(key)
    x = jax.random.normal(kx, (B, T, D), jnp.float32)
    weights, biases = init_params(kp, T, D, NB)

    fwd = jax.jit(functools.partial(relation_module_multiscale_forward,
                                    num_frames=T, img_feature_dim=D,
                                    num_bottleneck=NB))
    out = jax.block_until_ready(fwd(x, weights, biases))
    assert out.shape == (B, T - 1, NB)

    ref_fn = jax.jit(functools.partial(relation_module_multiscale_reference,
                                       num_frames=T, img_feature_dim=D,
                                       num_bottleneck=NB))
    ref = jax.block_until_ready(ref_fn(x, weights, biases))
    max_err = float(jnp.max(jnp.abs(out - ref)))
    assert bool(jnp.allclose(out, ref, atol=2e-3, rtol=2e-3)), (
        f"Pallas RelationModuleMultiScale mismatch, max abs err = {max_err}")

    print("KERNEL_OK")
</pallas_src>

<mosaic_0001>
module attributes {stable_mosaic.version = 11 : i64} {
  func.func @_relation_fusion_kernel(%arg0: i32, %arg1: memref<4xi32, #tpu.memory_space<smem>>, %arg2: memref<1x24x640xf32, #tpu.memory_space<vmem>>, %arg3: memref<1x640x256xf32, #tpu.memory_space<vmem>>, %arg4: memref<1x1x256xf32, #tpu.memory_space<vmem>>, %arg5: memref<1x8x256xf32, #tpu.memory_space<vmem>>) attributes {dimension_semantics = [#tpu.dimension_semantics<parallel>], iteration_bounds = array<i64: 4>, scalar_prefetch = 1 : i64, scratch_operands = 0 : i64, tpu.core_type = #tpu.core_type<tc>, window_params = [{transform_indices = @transform_0, window_bounds = array<i64: 1, 24, 640>}, {transform_indices = @transform_1, window_bounds = array<i64: 1, 640, 256>}, {transform_indices = @transform_2, window_bounds = array<i64: 1, 1, 256>}, {transform_indices = @transform_3, window_bounds = array<i64: 1, 8, 256>}]} {
    %c0 = arith.constant 0 : index
    %c0_0 = arith.constant 0 : index
    %c0_1 = arith.constant 0 : index
    %0 = vector.load %arg2[%c0, %c0_0, %c0_1] : memref<1x24x640xf32, #tpu.memory_space<vmem>>, vector<1x24x640xf32>
    %1 = vector.shape_cast %0 : vector<1x24x640xf32> to vector<24x640xf32>
    %cst = arith.constant 0.000000e+00 : f32
    %2 = vector.broadcast %cst : f32 to vector<24x640xf32>
    %3 = arith.maximumf %1, %2 : vector<24x640xf32>
    %c0_2 = arith.constant 0 : index
    %c0_3 = arith.constant 0 : index
    %c0_4 = arith.constant 0 : index
    %4 = vector.load %arg3[%c0_2, %c0_3, %c0_4] : memref<1x640x256xf32, #tpu.memory_space<vmem>>, vector<1x640x256xf32>
    %5 = vector.shape_cast %4 : vector<1x640x256xf32> to vector<640x256xf32>
    %cst_5 = arith.constant dense<0.000000e+00> : vector<24x256xf32>
    %6 = tpu.matmul %3, %5, %cst_5 {dimension_numbers = #tpu.dot_dimension_numbers<[1], [0], [0], [1], [0, 0, 1, 1], [], []>} : vector<24x640xf32>, vector<640x256xf32>, vector<24x256xf32> -> vector<24x256xf32>
    %c0_6 = arith.constant 0 : index
    %c0_7 = arith.constant 0 : index
    %c0_8 = arith.constant 0 : index
    %7 = vector.load %arg4[%c0_6, %c0_7, %c0_8] : memref<1x1x256xf32, #tpu.memory_space<vmem>>, vector<1x1x256xf32>
    %8 = vector.shape_cast %7 : vector<1x1x256xf32> to vector<1x256xf32>
    %9 = vector.broadcast %8 : vector<1x256xf32> to vector<24x256xf32>
    %10 = arith.addf %6, %9 : vector<24x256xf32>
    %cst_9 = arith.constant 0.000000e+00 : f32
    %11 = vector.broadcast %cst_9 : f32 to vector<24x256xf32>
    %12 = arith.maximumf %10, %11 : vector<24x256xf32>
    %cst_10 = arith.constant 0.000000e+00 : f32
    %13 = vector.broadcast %cst_10 : f32 to vector<8x256xf32>
    %14 = arith.index_cast %arg0 : i32 to index
    %15 = memref.load %arg1[%14] : memref<4xi32, #tpu.memory_space<smem>>
    %c0_i32 = arith.constant 0 : i32
    %16 = arith.cmpi sgt, %15, %c0_i32 : i32
    %17 = arith.extui %16 : i1 to i32
    %18 = arith.sitofp %17 : i32 to f32
    %19 = vector.extract_strided_slice %12 {offsets = [0, 0], sizes = [8, 256], strides = [1, 1]} : vector<24x256xf32> to vector<8x256xf32>
    %20 = vector.broadcast %18 : f32 to vector<8x256xf32>
    %21 = arith.mulf %19, %20 : vector<8x256xf32>
    %22 = arith.addf %13, %21 : vector<8x256xf32>
    %23 = arith.index_cast %arg0 : i32 to index
    %24 = memref.load %arg1[%23] : memref<4xi32, #tpu.memory_space<smem>>
    %c1_i32 = arith.constant 1 : i32
    %25 = arith.cmpi sgt, %24, %c1_i32 : i32
    %26 = arith.extui %25 : i1 to i32
    %27 = arith.sitofp %26 : i32 to f32
    %28 = vector.extract_strided_slice %12 {offsets = [8, 0], sizes = [8, 256], strides = [1, 1]} : vector<24x256xf32> to vector<8x256xf32>
    %29 = vector.broadcast %27 : f32 to vector<8x256xf32>
    %30 = arith.mulf %28, %29 : vector<8x256xf32>
    %31 = arith.addf %22, %30 : vector<8x256xf32>
    %32 = arith.index_cast %arg0 : i32 to index
    %33 = memref.load %arg1[%32] : memref<4xi32, #tpu.memory_space<smem>>
    %c2_i32 = arith.constant 2 : i32
    %34 = arith.cmpi sgt, %33, %c2_i32 : i32
    %35 = arith.extui %34 : i1 to i32
    %36 = arith.sitofp %35 : i32 to f32
    %37 = vector.extract_strided_slice %12 {offsets = [16, 0], sizes = [8, 256], strides = [1, 1]} : vector<24x256xf32> to vector<8x256xf32>
    %38 = vector.broadcast %36 : f32 to vector<8x256xf32>
    %39 = arith.mulf %37, %38 : vector<8x256xf32>
    %40 = arith.addf %31, %39 : vector<8x256xf32>
    %c0_11 = arith.constant 0 : index
    %c0_12 = arith.constant 0 : index
    %c0_13 = arith.constant 0 : index
    %41 = vector.load %arg5[%c0_11, %c0_12, %c0_13] : memref<1x8x256xf32, #tpu.memory_space<vmem>>, vector<1x8x256xf32>
    %42 = vector.shape_cast %41 : vector<1x8x256xf32> to vector<8x256xf32>
    %43 = vector.shape_cast %40 : vector<8x256xf32> to vector<1x8x256xf32>
    tpu.vector_store %arg5[%c0_11, %c0_12, %c0_13], %43 {strides = array<i32>} : memref<1x8x256xf32, #tpu.memory_space<vmem>>, vector<1x8x256xf32>,
    return
  }
  func.func @transform_0(%arg0: i32, %arg1: memref<4xi32, #tpu.memory_space<smem>>) -> (i32, i32, i32) {
    %c0_i32 = arith.constant 0 : i32
    %c0_i32_0 = arith.constant 0 : i32
    %c0_i32_1 = arith.constant 0 : i32
    return %arg0, %c0_i32, %c0_i32_0 : i32, i32, i32
  }
  func.func @transform_1(%arg0: i32, %arg1: memref<4xi32, #tpu.memory_space<smem>>) -> (i32, i32, i32) {
    %c0_i32 = arith.constant 0 : i32
    %c0_i32_0 = arith.constant 0 : i32
    %c0_i32_1 = arith.constant 0 : i32
    return %arg0, %c0_i32, %c0_i32_0 : i32, i32, i32
  }
  func.func @transform_2(%arg0: i32, %arg1: memref<4xi32, #tpu.memory_space<smem>>) -> (i32, i32, i32) {
    %c0_i32 = arith.constant 0 : i32
    %c0_i32_0 = arith.constant 0 : i32
    %c0_i32_1 = arith.constant 0 : i32
    return %arg0, %c0_i32, %c0_i32_0 : i32, i32, i32
  }
  func.func @transform_3(%arg0: i32, %arg1: memref<4xi32, #tpu.memory_space<smem>>) -> (i32, i32, i32) {
    %c0_i32 = arith.constant 0 : i32
    %c0_i32_0 = arith.constant 0 : i32
    %c0_i32_1 = arith.constant 0 : i32
    return %arg0, %c0_i32, %c0_i32_0 : i32, i32, i32
  }
}

</mosaic_0001>

<llo_original>
// kernel: relation_module_multiscale_forward.1
$region0: #{relation_module_multiscale_forward.1}
  #allocation0 [shape = 'u32[]', space=smem, size = 0x4, offset = 0x4, fixed_abs, tag = 'smem constant byte address 0x4 - core index']
  #allocation1 [shape = 'u32[144,128]{1,0:T(1,128)}', space=vmem, size = 0x12000, scoped, tag = 'internal scratch']
  #allocation2 [shape = 's32[1]{0}', space=sflag, size = 0x4, scoped, tag = 'scoped memory for relation_module_multiscale_forward.1']
  #allocation3 [shape = 'u8[512]{0}', space=smem, size = 0x200, scoped, tag = 'prefetched SMEM operand 0']
  %s0 = inlined_call_operand.vmem [shape: s32[4], index: 0, kind: input, shape index: {}]
  %s1 = inlined_call_operand.vmem [shape: f32[4,24,640], index: 1, kind: input, shape index: {}]
  %s2 = inlined_call_operand.vmem [shape: f32[4,640,256], index: 2, kind: input, shape index: {}]
  %s3 = inlined_call_operand.vmem [shape: f32[4,1,256], index: 3, kind: input, shape index: {}]
  %s4 = inlined_call_operand.vmem [shape: f32[4,8,256], index: 4, kind: output, shape index: {}]
  %s5 = sld [smem:[#allocation0]]
  $region45: #{relation_module_multiscale_forward.1} parent=0
    _
  %s7 = ssub.s32 1, %s5
  %s8 = scalar_select 0, %s7, %s5
  %s9 = sshll.u32 %s0, 4
  %s10 = int_to_ptr.vmem [resolvable:$true] %s9
  %12 = dma.vmem_to_smem %s10, 16, [#allocation3], [#allocation2]
  %13 = dma.done [#allocation2], 16
  %14 = sfence
  loop: start=0, step=1, limit=6
  $region2: #{relation_module_multiscale_forward.1} parent=0 // loop_pre_header
    _
  $region3: #{relation_module_multiscale_forward.1} parent=0 // loop_header
    %s16 = sphi 0, %s20
    %p17 = scmp.ge.s32.totalorder %s16, 6
    %s26 = sphi 0, %s28
    %s29 = sphi 0, %s26
    %s30 = sphi 0, %s29
    %s46 = sphi 0, %s30
    %s52 = sphi 0, %s54
    %s55 = sphi 0, %s52
    %s56 = sphi 0, %s55
    %s72 = sphi 0, %s56
    %s78 = sphi 0, %s80
    %s81 = sphi 0, %s78
    %s82 = sphi 0, %s81
    %s98 = sphi 0, %s82
    %s104 = sphi 0, %s106
    %s107 = sphi 0, %s104
    %s108 = sphi 0, %s107
    %s124 = sphi 0, %s108
  $region4: #{relation_module_multiscale_forward.1} parent=0 // loop_header_branch
    %19 = sbr.rel (%p17) target = $region8
  $region5: #{relation_module_multiscale_forward.1} parent=0 // loop_body
    %s21 = ssub.s32 %s16, 1
    %s22 = ssub.s32 %s16, 2
    %s23 = sadd.s32 %s16, 1
    %s24 = ssub.s32 %s16, %s23
    %p25 = scmp.eq.s32.totalorder %s24, 0
    %s27 = sadd.s32 %s26, 1
    %s28 = scalar_select %p25, %s26, %s27
    %p31 = pneg %p25
    %p32 = scmp.eq.s32.totalorder %s16, 3
    %p33 = por %p31, %p32
    %p34 = scmp.ne.s32.totalorder %s26, %s29
    %p35 = scmp.eq.s32.totalorder %s16, 0
    %p36 = por %p34, %p35
    %p37 = scmp.ne.s32.totalorder %s26, %s29
    %p38 = scmp.eq.s32.totalorder %s21, 3
    %p39 = por %p37, %p38
    %p40 = scmp.ne.s32.totalorder %s29, %s30
    %p41 = scmp.eq.s32.totalorder %s21, 0
    %p42 = por %p40, %p41
    %p43 = scmp.ne.s32.totalorder %s29, %s30
    %p44 = scmp.eq.s32.totalorder %s22, 3
    %p45 = por %p43, %p44
    %p47 = scmp.ne.s32.totalorder %s30, %s46
    %p48 = scmp.eq.s32.totalorder %s22, 0
    %p49 = por %p47, %p48
    %s50 = ssub.s32 %s16, %s23
    %p51 = scmp.eq.s32.totalorder %s50, 0
    %s53 = sadd.s32 %s52, 1
    %s54 = scalar_select %p51, %s52, %s53
    %p57 = pneg %p51
    %p58 = scmp.eq.s32.totalorder %s16, 3
    %p59 = por %p57, %p58
    %p60 = scmp.ne.s32.totalorder %s52, %s55
    %p61 = scmp.eq.s32.totalorder %s16, 0
    %p62 = por %p60, %p61
    %p63 = scmp.ne.s32.totalorder %s52, %s55
    %p64 = scmp.eq.s32.totalorder %s21, 3
    %p65 = por %p63, %p64
    %p66 = scmp.ne.s32.totalorder %s55, %s56
    %p67 = scmp.eq.s32.totalorder %s21, 0
    %p68 = por %p66, %p67
    %p69 = scmp.ne.s32.totalorder %s55, %s56
    %p70 = scmp.eq.s32.totalorder %s22, 3
    %p71 = por %p69, %p70
    %p73 = scmp.ne.s32.totalorder %s56, %s72
    %p74 = scmp.eq.s32.totalorder %s22, 0
    %p75 = por %p73, %p74
    %s76 = ssub.s32 %s16, %s23
    %p77 = scmp.eq.s32.totalorder %s76, 0
    %s79 = sadd.s32 %s78, 1
    %s80 = scalar_select %p77, %s78, %s79
    %p83 = pneg %p77
    %p84 = scmp.eq.s32.totalorder %s16, 3
    %p85 = por %p83, %p84
    %p86 = scmp.ne.s32.totalorder %s78, %s81
    %p87 = scmp.eq.s32.totalorder %s16, 0
    %p88 = por %p86, %p87
    %p89 = scmp.ne.s32.totalorder %s78, %s81
    %p90 = scmp.eq.s32.totalorder %s21, 3
    %p91 = por %p89, %p90
    %p92 = scmp.ne.s32.totalorder %s81, %s82
    %p93 = scmp.eq.s32.totalorder %s21, 0
    %p94 = por %p92, %p93
    %p95 = scmp.ne.s32.totalorder %s81, %s82
    %p96 = scmp.eq.s32.totalorder %s22, 3
    %p97 = por %p95, %p96
    %p99 = scmp.ne.s32.totalorder %s82, %s98
    %p100 = scmp.eq.s32.totalorder %s22, 0
    %p101 = por %p99, %p100
    %s102 = ssub.s32 %s16, %s23
    %p103 = scmp.eq.s32.totalorder %s102, 0
    %s105 = sadd.s32 %s104, 1
    %s106 = scalar_select %p103, %s104, %s105
    %p109 = pneg %p103
    %p110 = scmp.eq.s32.totalorder %s16, 3
    %p111 = por %p109, %p110
    %p112 = scmp.ne.s32.totalorder %s104, %s107
    %p113 = scmp.eq.s32.totalorder %s16, 0
    %p114 = por %p112, %p113
    %p115 = scmp.ne.s32.totalorder %s104, %s107
    %p116 = scmp.eq.s32.totalorder %s21, 3
    %p117 = por %p115, %p116
    %p118 = scmp.ne.s32.totalorder %s107, %s108
    %p119 = scmp.eq.s32.totalorder %s21, 0
    %p120 = por %p118, %p119
    %p121 = scmp.ne.s32.totalorder %s107, %s108
    %p122 = scmp.eq.s32.totalorder %s22, 3
    %p123 = por %p121, %p122
    %p125 = scmp.ne.s32.totalorder %s108, %s124
    %p126 = scmp.eq.s32.totalorder %s22, 0
    %p127 = por %p125, %p126
    %p128 = scmp.le.s32.totalorder 1, %s16
    %p129 = scmp.lt.s32.totalorder %s16, 5
    %p130 = pnand %p128, %p129
    %p131 = pneg %p130
    // Predicated region
    $region9: #{relation_module_multiscale_forward.1} parent=5 // pred_check
      _
    $region10: #{relation_module_multiscale_forward.1} parent=5 // pred_check_branch
      %133 = sbr.rel (%p130) target = $region12
    $region11: #{relation_module_multiscale_forward.1} parent=5 // pred_region
      %s134 = ssub.s32 %s16, 1
    $region12: #{relation_module_multiscale_forward.1} parent=5 // pred_fallthru
      _
    %p135 = scmp.lt.s32.totalorder %s16, 4
    // Predicated region
    $region13: #{relation_module_multiscale_forward.1} parent=5 // pred_check
      %p136 = pneg %p135
    $region14: #{relation_module_multiscale_forward.1} parent=5 // pred_check_branch
      %138 = sbr.rel (%p136) target = $region16
    $region15: #{relation_module_multiscale_forward.1} parent=5 // pred_region
      // Predicated region
      $region17: #{relation_module_multiscale_forward.1} parent=15 // pred_check
        %p139 = pneg %p36
      $region18: #{relation_module_multiscale_forward.1} parent=15 // pred_check_branch
        %141 = sbr.rel (%p139) target = $region20
      $region19: #{relation_module_multiscale_forward.1} parent=15 // pred_region
        %p142 = scmp.lt.s32.totalorder %s16, 3
        %s143 = scalar_select %p142, %s16, 3
        %s144 = smul.addr %s143, 15
        %s145 = smul.addr %s144, 8
        %s146 = scalar_lea.vmem %s1, %s145
      $region20: #{relation_module_multiscale_forward.1} parent=15 // pred_fallthru
        _
      // Predicated region
      $region21: #{relation_module_multiscale_forward.1} parent=15 // pred_check
        %p147 = pneg %p62
      $region22: #{relation_module_multiscale_forward.1} parent=15 // pred_check_branch
        %149 = sbr.rel (%p147) target = $region24
      $region23: #{relation_module_multiscale_forward.1} parent=15 // pred_region
        %p150 = scmp.lt.s32.totalorder %s16, 3
        %s151 = scalar_select %p150, %s16, 3
        %s152 = smul.addr %s151, 160
        %s153 = smul.addr %s152, 8
        %s154 = scalar_lea.vmem %s2, %s153
      $region24: #{relation_module_multiscale_forward.1} parent=15 // pred_fallthru
        _
      // Predicated region
      $region25: #{relation_module_multiscale_forward.1} parent=15 // pred_check
        %p155 = pneg %p88
      $region26: #{relation_module_multiscale_forward.1} parent=15 // pred_check_branch
        %157 = sbr.rel (%p155) target = $region28
      $region27: #{relation_module_multiscale_forward.1} parent=15 // pred_region
        %p158 = scmp.lt.s32.totalorder %s16, 3
        %s159 = scalar_select %p158, %s16, 3
        %s160 = smul.addr %s159, 2
        %s161 = scalar_lea.vmem %s3, %s160
      $region28: #{relation_module_multiscale_forward.1} parent=15 // pred_fallthru
        _
    $region16: #{relation_module_multiscale_forward.1} parent=5 // pred_fallthru
      _
    %p162 = scmp.le.s32.totalorder 1, %s16
    %p163 = scmp.lt.s32.totalorder %s16, 5
    %p164 = pnand %p162, %p163
    %p165 = pneg %p164
    // Predicated region
    $region29: #{relation_module_multiscale_forward.1} parent=5 // pred_check
      _
    $region30: #{relation_module_multiscale_forward.1} parent=5 // pred_check_branch
      %167 = sbr.rel (%p164) target = $region32
    $region31: #{relation_module_multiscale_forward.1} parent=5 // pred_region
      %s168 = ssub.s32 %s16, 1
      %p169 = scmp.lt.s32.totalorder %s21, 3
      %s170 = scalar_select %p169, %s21, 3
      %s171 = smul.addr %s170, 15
      %s172 = smul.addr %s171, 8
      %s173 = scalar_lea.vmem %s1, %s172
      %p174 = pneg %p42
      %p175 = pneg %p39
      %p176 = scmp.lt.s32.totalorder %s21, 3
      %s177 = scalar_select %p176, %s21, 3
      %s178 = smul.addr %s177, 160
      %s179 = smul.addr %s178, 8
      %s180 = scalar_lea.vmem %s2, %s179
      %p181 = pneg %p68
      %p182 = pneg %p65
      %p183 = scmp.lt.s32.totalorder %s21, 3
      %s184 = scalar_select %p183, %s21, 3
      %s185 = smul.addr %s184, 2
      %s186 = scalar_lea.vmem %s3, %s185
      %p187 = pneg %p94
      %p188 = pneg %p91
      %p189 = pneg %p120
      %p190 = pneg %p117
      %p191 = scmp.lt.s32.totalorder %s21, 3
      %s192 = scalar_select %p191, %s21, 3
      %s193 = smul.addr %s192, 2
      %s194 = smul.addr %s193, 8
      %s195 = scalar_lea.vmem %s4, %s194
      %p196 = scmp.lt.s32.totalorder %s21, 3
      %s197 = scalar_select %p196, %s21, 3
      %s198 = smul.addr %s197, 15
      %s199 = smul.addr %s198, 8
      %s200 = scalar_lea.vmem %s1, %s199
      %p201 = scmp.lt.s32.totalorder %s21, 3
      %s202 = scalar_select %p201, %s21, 3
      %s203 = smul.addr %s202, 160
      %s204 = smul.addr %s203, 8
      %s205 = scalar_lea.vmem %s2, %s204
      %p206 = scmp.lt.s32.totalorder %s21, 3
      %s207 = scalar_select %p206, %s21, 3
      %s208 = smul.addr %s207, 2
      %s209 = scalar_lea.vmem %s3, %s208
      %p210 = scmp.lt.s32.totalorder %s21, 3
      %s211 = scalar_select %p210, %s21, 3
      %s212 = smul.addr %s211, 2
      %s213 = smul.addr %s212, 8
      %s214 = scalar_lea.vmem %s4, %s213
      %v215 = vld [vmem:[%s200] sm:$0xff]
      %v216 = vld [vmem:[%s200 + $0x8] sm:$0xff]
      %v217 = vld [vmem:[%s200 + $0x10] sm:$0xff]
      %v218 = vld [vmem:[%s200 + $0x18] sm:$0xff]
      %v219 = vld [vmem:[%s200 + $0x20] sm:$0xff]
      %v220 = vld [vmem:[%s200 + $0x28] sm:$0xff]
      %v221 = vld [vmem:[%s200 + $0x30] sm:$0xff]
      %v222 = vld [vmem:[%s200 + $0x38] sm:$0xff]
      %v223 = vld [vmem:[%s200 + $0x40] sm:$0xff]
      %v224 = vld [vmem:[%s200 + $0x48] sm:$0xff]
      %v225 = vld [vmem:[%s200 + $0x50] sm:$0xff]
      %v226 = vld [vmem:[%s200 + $0x58] sm:$0xff]
      %v227 = vld [vmem:[%s200 + $0x60] sm:$0xff]
      %v228 = vld [vmem:[%s200 + $0x68] sm:$0xff]
      %v229 = vld [vmem:[%s200 + $0x70] sm:$0xff]
      %v230 = vmax.f32 %v215, 0.0
      %v231 = vmax.f32 %v216, 0.0
      %v232 = vmax.f32 %v217, 0.0
      %v233 = vmax.f32 %v218, 0.0
      %v234 = vmax.f32 %v219, 0.0
      %v235 = vmax.f32 %v220, 0.0
      %v236 = vmax.f32 %v221, 0.0
      %v237 = vmax.f32 %v222, 0.0
      %v238 = vmax.f32 %v223, 0.0
      %v239 = vmax.f32 %v224, 0.0
      %v240 = vmax.f32 %v225, 0.0
      %v241 = vmax.f32 %v226, 0.0
      %v242 = vmax.f32 %v227, 0.0
      %v243 = vmax.f32 %v228, 0.0
      %v244 = vmax.f32 %v229, 0.0
      %v245 = vld [vmem:[%s205] sm:$0xff]
      %v246 = vld [vmem:[%s205 + $0x8] sm:$0xff]
      %v247 = vld [vmem:[%s205 + $0x10] sm:$0xff]
      %v248 = vld [vmem:[%s205 + $0x18] sm:$0xff]
      %v249 = vld [vmem:[%s205 + $0x20] sm:$0xff]
      %v250 = vld [vmem:[%s205 + $0x28] sm:$0xff]
      %v251 = vld [vmem:[%s205 + $0x30] sm:$0xff]
      %v252 = vld [vmem:[%s205 + $0x38] sm:$0xff]
      %v253 = vld [vmem:[%s205 + $0x40] sm:$0xff]
      %v254 = vld [vmem:[%s205 + $0x48] sm:$0xff]
      %v255 = vld [vmem:[%s205 + $0x50] sm:$0xff]
      %v256 = vld [vmem:[%s205 + $0x58] sm:$0xff]
      %v257 = vld [vmem:[%s205 + $0x60] sm:$0xff]
      %v258 = vld [vmem:[%s205 + $0x68] sm:$0xff]
      %v259 = vld [vmem:[%s205 + $0x70] sm:$0xff]
      %v260 = vld [vmem:[%s205 + $0x78] sm:$0xff]
      %v261 = vld [vmem:[%s205 + $0x80] sm:$0xff]
      %v262 = vld [vmem:[%s205 + $0x88] sm:$0xff]
      %v263 = vld [vmem:[%s205 + $0x90] sm:$0xff]
      %v264 = vld [vmem:[%s205 + $0x98] sm:$0xff]
      %v265 = vld [vmem:[%s205 + $0xa0] sm:$0xff]
      %v266 = vld [vmem:[%s205 + $0xa8] sm:$0xff]
      %v267 = vld [vmem:[%s205 + $0xb0] sm:$0xff]
      %v268 = vld [vmem:[%s205 + $0xb8] sm:$0xff]
      %v269 = vld [vmem:[%s205 + $0xc0] sm:$0xff]
      %v270 = vld [vmem:[%s205 + $0xc8] sm:$0xff]
      %v271 = vld [vmem:[%s205 + $0xd0] sm:$0xff]
      %v272 = vld [vmem:[%s205 + $0xd8] sm:$0xff]
      %v273 = vld [vmem:[%s205 + $0xe0] sm:$0xff]
      %v274 = vld [vmem:[%s205 + $0xe8] sm:$0xff]
      %v275 = vld [vmem:[%s205 + $0xf0] sm:$0xff]
      %v276 = vld [vmem:[%s205 + $0xf8] sm:$0xff]
      %v277 = vld [vmem:[%s205 + $0x100] sm:$0xff]
      %v278 = vld [vmem:[%s205 + $0x108] sm:$0xff]
      %v279 = vld [vmem:[%s205 + $0x110] sm:$0xff]
      %v280 = vld [vmem:[%s205 + $0x118] sm:$0xff]
      %v281 = vld [vmem:[%s205 + $0x120] sm:$0xff]
      %v282 = vld [vmem:[%s205 + $0x128] sm:$0xff]
      %v283 = vld [vmem:[%s205 + $0x130] sm:$0xff]
      %v284 = vld [vmem:[%s205 + $0x138] sm:$0xff]
      %v285 = vld [vmem:[%s205 + $0x140] sm:$0xff]
      %v286 = vld [vmem:[%s205 + $0x148] sm:$0xff]
      %v287 = vld [vmem:[%s205 + $0x150] sm:$0xff]
      %v288 = vld [vmem:[%s205 + $0x158] sm:$0xff]
      %v289 = vld [vmem:[%s205 + $0x160] sm:$0xff]
      %v290 = vld [vmem:[%s205 + $0x168] sm:$0xff]
      %v291 = vld [vmem:[%s205 + $0x170] sm:$0xff]
      %v292 = vld [vmem:[%s205 + $0x178] sm:$0xff]
      %v293 = vld [vmem:[%s205 + $0x180] sm:$0xff]
      %v294 = vld [vmem:[%s205 + $0x188] sm:$0xff]
      %v295 = vld [vmem:[%s205 + $0x190] sm:$0xff]
      %v296 = vld [vmem:[%s205 + $0x198] sm:$0xff]
      %v297 = vld [vmem:[%s205 + $0x1a0] sm:$0xff]
      %v298 = vld [vmem:[%s205 + $0x1a8] sm:$0xff]
      %v299 = vld [vmem:[%s205 + $0x1b0] sm:$0xff]
      %v300 = vld [vmem:[%s205 + $0x1b8] sm:$0xff]
      %v301 = vld [vmem:[%s205 + $0x1c0] sm:$0xff]
      %v302 = vld [vmem:[%s205 + $0x1c8] sm:$0xff]
      %v303 = vld [vmem:[%s205 + $0x1d0] sm:$0xff]
      %v304 = vld [vmem:[%s205 + $0x1d8] sm:$0xff]
      %v305 = vld [vmem:[%s205 + $0x1e0] sm:$0xff]
      %v306 = vld [vmem:[%s205 + $0x1e8] sm:$0xff]
      %v307 = vld [vmem:[%s205 + $0x1f0] sm:$0xff]
      %v308 = vld [vmem:[%s205 + $0x1f8] sm:$0xff]
      %v309 = vld [vmem:[%s205 + $0x200] sm:$0xff]
      %v310 = vld [vmem:[%s205 + $0x208] sm:$0xff]
      %v311 = vld [vmem:[%s205 + $0x210] sm:$0xff]
      %v312 = vld [vmem:[%s205 + $0x218] sm:$0xff]
      %v313 = vld [vmem:[%s205 + $0x220] sm:$0xff]
      %v314 = vld [vmem:[%s205 + $0x228] sm:$0xff]
      %v315 = vld [vmem:[%s205 + $0x230] sm:$0xff]
      %v316 = vld [vmem:[%s205 + $0x238] sm:$0xff]
      %v317 = vld [vmem:[%s205 + $0x240] sm:$0xff]
      %v318 = vld [vmem:[%s205 + $0x248] sm:$0xff]
      %v319 = vld [vmem:[%s205 + $0x250] sm:$0xff]
      %v320 = vld [vmem:[%s205 + $0x258] sm:$0xff]
      %v321 = vld [vmem:[%s205 + $0x260] sm:$0xff]
      %v322 = vld [vmem:[%s205 + $0x268] sm:$0xff]
      %v323 = vld [vmem:[%s205 + $0x270] sm:$0xff]
      %v324 = vld [vmem:[%s205 + $0x278] sm:$0xff]
      %v325 = vld [vmem:[%s205 + $0x280] sm:$0xff]
      %v326 = vld [vmem:[%s205 + $0x288] sm:$0xff]
      %v327 = vld [vmem:[%s205 + $0x290] sm:$0xff]
      %v328 = vld [vmem:[%s205 + $0x298] sm:$0xff]
      %v329 = vld [vmem:[%s205 + $0x2a0] sm:$0xff]
      %v330 = vld [vmem:[%s205 + $0x2a8] sm:$0xff]
      %v331 = vld [vmem:[%s205 + $0x2b0] sm:$0xff]
      %v332 = vld [vmem:[%s205 + $0x2b8] sm:$0xff]
      %v333 = vld [vmem:[%s205 + $0x2c0] sm:$0xff]
      %v334 = vld [vmem:[%s205 + $0x2c8] sm:$0xff]
      %v335 = vld [vmem:[%s205 + $0x2d0] sm:$0xff]
      %v336 = vld [vmem:[%s205 + $0x2d8] sm:$0xff]
      %v337 = vld [vmem:[%s205 + $0x2e0] sm:$0xff]
      %v338 = vld [vmem:[%s205 + $0x2e8] sm:$0xff]
      %v339 = vld [vmem:[%s205 + $0x2f0] sm:$0xff]
      %v340 = vld [vmem:[%s205 + $0x2f8] sm:$0xff]
      %v341 = vld [vmem:[%s205 + $0x300] sm:$0xff]
      %v342 = vld [vmem:[%s205 + $0x308] sm:$0xff]
      %v343 = vld [vmem:[%s205 + $0x310] sm:$0xff]
      %v344 = vld [vmem:[%s205 + $0x318] sm:$0xff]
      %v345 = vld [vmem:[%s205 + $0x320] sm:$0xff]
      %v346 = vld [vmem:[%s205 + $0x328] sm:$0xff]
      %v347 = vld [vmem:[%s205 + $0x330] sm:$0xff]
      %v348 = vld [vmem:[%s205 + $0x338] sm:$0xff]
      %v349 = vld [vmem:[%s205 + $0x340] sm:$0xff]
      %v350 = vld [vmem:[%s205 + $0x348] sm:$0xff]
      %v351 = vld [vmem:[%s205 + $0x350] sm:$0xff]
      %v352 = vld [vmem:[%s205 + $0x358] sm:$0xff]
      %v353 = vld [vmem:[%s205 + $0x360] sm:$0xff]
      %v354 = vld [vmem:[%s205 + $0x368] sm:$0xff]
      %v355 = vld [vmem:[%s205 + $0x370] sm:$0xff]
      %v356 = vld [vmem:[%s205 + $0x378] sm:$0xff]
      %v357 = vld [vmem:[%s205 + $0x380] sm:$0xff]
      %v358 = vld [vmem:[%s205 + $0x388] sm:$0xff]
      %v359 = vld [vmem:[%s205 + $0x390] sm:$0xff]
      %v360 = vld [vmem:[%s205 + $0x398] sm:$0xff]
      %v361 = vld [vmem:[%s205 + $0x3a0] sm:$0xff]
      %v362 = vld [vmem:[%s205 + $0x3a8] sm:$0xff]
      %v363 = vld [vmem:[%s205 + $0x3b0] sm:$0xff]
      %v364 = vld [vmem:[%s205 + $0x3b8] sm:$0xff]
      %v365 = vld [vmem:[%s205 + $0x3c0] sm:$0xff]
      %v366 = vld [vmem:[%s205 + $0x3c8] sm:$0xff]
      %v367 = vld [vmem:[%s205 + $0x3d0] sm:$0xff]
      %v368 = vld [vmem:[%s205 + $0x3d8] sm:$0xff]
      %v369 = vld [vmem:[%s205 + $0x3e0] sm:$0xff]
      %v370 = vld [vmem:[%s205 + $0x3e8] sm:$0xff]
      %v371 = vld [vmem:[%s205 + $0x3f0] sm:$0xff]
      %v372 = vld [vmem:[%s205 + $0x3f8] sm:$0xff]
      %v373 = vld [vmem:[%s205 + $0x400] sm:$0xff]
      %v374 = vld [vmem:[%s205 + $0x408] sm:$0xff]
      %v375 = vld [vmem:[%s205 + $0x410] sm:$0xff]
      %v376 = vld [vmem:[%s205 + $0x418] sm:$0xff]
      %v377 = vld [vmem:[%s205 + $0x420] sm:$0xff]
      %v378 = vld [vmem:[%s205 + $0x428] sm:$0xff]
      %v379 = vld [vmem:[%s205 + $0x430] sm:$0xff]
      %v380 = vld [vmem:[%s205 + $0x438] sm:$0xff]
      %v381 = vld [vmem:[%s205 + $0x440] sm:$0xff]
      %v382 = vld [vmem:[%s205 + $0x448] sm:$0xff]
      %v383 = vld [vmem:[%s205 + $0x450] sm:$0xff]
      %v384 = vld [vmem:[%s205 + $0x458] sm:$0xff]
      %v385 = vld [vmem:[%s205 + $0x460] sm:$0xff]
      %v386 = vld [vmem:[%s205 + $0x468] sm:$0xff]
      %v387 = vld [vmem:[%s205 + $0x470] sm:$0xff]
      %v388 = vld [vmem:[%s205 + $0x478] sm:$0xff]
      %v389 = vld [vmem:[%s205 + $0x480] sm:$0xff]
      %v390 = vld [vmem:[%s205 + $0x488] sm:$0xff]
      %v391 = vld [vmem:[%s205 + $0x490] sm:$0xff]
      %v392 = vld [vmem:[%s205 + $0x498] sm:$0xff]
      %v393 = vld [vmem:[%s205 + $0x4a0] sm:$0xff]
      %v394 = vld [vmem:[%s205 + $0x4a8] sm:$0xff]
      %v395 = vld [vmem:[%s205 + $0x4b0] sm:$0xff]
      %v396 = vld [vmem:[%s205 + $0x4b8] sm:$0xff]
      %v397 = vld [vmem:[%s205 + $0x4c0] sm:$0xff]
      %v398 = vld [vmem:[%s205 + $0x4c8] sm:$0xff]
      %v399 = vld [vmem:[%s205 + $0x4d0] sm:$0xff]
      %v400 = vld [vmem:[%s205 + $0x4d8] sm:$0xff]
      %v401 = vld [vmem:[%s205 + $0x4e0] sm:$0xff]
      %v402 = vld [vmem:[%s205 + $0x4e8] sm:$0xff]
      %v403 = vld [vmem:[%s205 + $0x4f0] sm:$0xff]
      %v404 = vld [vmem:[%s205 + $0x4f8] sm:$0xff]
      %v405 = vld [vmem:[%s209] sm:$0x3]
      %v407 = vlaneseq
      %v408 = vshrl.u32 %v407, 7
      %v409 = vsub.s32 0, %v408
      %v410 = vrot.slane %v405, %v409
      %v411 = vlaneseq
      %v412 = vshrl.u32 %v411, 7
      %v413 = vsub.s32 1, %v412
      %v414 = vrot.slane %v405, %v413
      %417 = vmatprep.subr.mxu0 %v246
      %418 = vmatpush1.msra.mxu0 %v245
      %419 = vmatprep.subr.mxu0 %v248
      %420 = vmatpush1.msra.mxu0 %v247
      %421 = vmatprep.subr.mxu0 %v250
      %422 = vmatpush1.msra.mxu0 %v249
      %423 = vmatprep.subr.mxu0 %v252
      %424 = vmatpush1.msra.mxu0 %v251
      %425 = vmatprep.subr.mxu0 %v254
      %426 = vmatpush1.msra.mxu0 %v253
      %427 = vmatprep.subr.mxu0 %v256
      %428 = vmatpush1.msra.mxu0 %v255
      %429 = vmatprep.subr.mxu0 %v258
      %430 = vmatpush1.msra.mxu0 %v257
      %431 = vmatprep.subr.mxu0 %v260
      %432 = vmatpush1.msra.mxu0 %v259
      %433 = vmatprep.subr.mxu0 %v262
      %434 = vmatpush1.msra.mxu0 %v261
      %435 = vmatprep.subr.mxu0 %v264
      %436 = vmatpush1.msra.mxu0 %v263
      %437 = vmatprep.subr.mxu0 %v266
      %438 = vmatpush1.msra.mxu0 %v265
      %439 = vmatprep.subr.mxu0 %v268
      %440 = vmatpush1.msra.mxu0 %v267
      %441 = vmatprep.subr.mxu0 %v270
      %442 = vmatpush1.msra.mxu0 %v269
      %443 = vmatprep.subr.mxu0 %v272
      %444 = vmatpush1.msra.mxu0 %v271
      %445 = vmatprep.subr.mxu0 %v274
      %446 = vmatpush1.msra.mxu0 %v273
      %447 = vmatprep.subr.mxu0 %v276
      %448 = vmatpush1.msra.mxu0 %v275
      %449 = vmatprep.subr.mxu0 %v278
      %450 = vmatpush1.msra.mxu0 %v277
      %451 = vmatprep.subr.mxu0 %v280
      %452 = vmatpush1.msra.mxu0 %v279
      %453 = vmatprep.subr.mxu0 %v282
      %454 = vmatpush1.msra.mxu0 %v281
      %455 = vmatprep.subr.mxu0 %v284
      %456 = vmatpush1.msra.mxu0 %v283
      %457 = vmatprep.subr.mxu0 %v286
      %458 = vmatpush1.msra.mxu0 %v285
      %459 = vmatprep.subr.mxu0 %v288
      %460 = vmatpush1.msra.mxu0 %v287
      %461 = vmatprep.subr.mxu0 %v290
      %462 = vmatpush1.msra.mxu0 %v289
      %463 = vmatprep.subr.mxu0 %v292
      %464 = vmatpush1.msra.mxu0 %v291
      %465 = vmatprep.subr.mxu0 %v294
      %466 = vmatpush1.msra.mxu0 %v293
      %467 = vmatprep.subr.mxu0 %v296
      %468 = vmatpush1.msra.mxu0 %v295
      %469 = vmatprep.subr.mxu0 %v298
      %470 = vmatpush1.msra.mxu0 %v297
      %471 = vmatprep.subr.mxu0 %v300
      %472 = vmatpush1.msra.mxu0 %v299
      %473 = vmatprep.subr.mxu0 %v302
      %474 = vmatpush1.msra.mxu0 %v301
      %475 = vmatprep.subr.mxu0 %v304
      %476 = vmatpush1.msra.mxu0 %v303
      %477 = vmatprep.subr.mxu0 %v306
      %478 = vmatpush1.msra.mxu0 %v305
      %479 = vmatprep.subr.mxu0 %v308
      %480 = vmatpush1.msra.mxu0 %v307
      %481 = vmatprep.mubr.f32.mxu0 %v231
      %482 = vmatmul.mubr.f32.gmra.mrb[0].mxu0 %v230
      %v483 = vpop.f32.mrb[0].mxu0
      %v484 = vadd.f32 %v410, %v483
      %v485 = vpop.f32.mrb[0].mxu0
      %v486 = vadd.f32 %v414, %v485
      %487 = vmatprep.mubr.f32.mxu0 %v236
      %488 = vmatmul.mubr.f32.gmra.mrb[0].mxu0 %v235
      %v489 = vpop.f32.mrb[0].mxu0
      %v490 = vadd.f32 %v410, %v489
      %v491 = vpop.f32.mrb[0].mxu0
      %v492 = vadd.f32 %v414, %v491
      %493 = vmatprep.mubr.f32.mxu0 %v241
      %494 = vmatmul.mubr.f32.gmra.mrb[0].mxu0 %v240
      %v495 = vpop.f32.mrb[0].mxu0
      %v496 = vadd.f32 %v410, %v495
      %v497 = vpop.f32.mrb[0].mxu0
      %v498 = vadd.f32 %v414, %v497
      %499 = vdwg.mxu0
      %500 = vmatprep.subr.mxu0 %v310
      %501 = vmatpush1.msra.mxu0 %v309
      %502 = vmatprep.subr.mxu0 %v312
      %503 = vmatpush1.msra.mxu0 %v311
      %504 = vmatprep.subr.mxu0 %v314
      %505 = vmatpush1.msra.mxu0 %v313
      %506 = vmatprep.subr.mxu0 %v316
      %507 = vmatpush1.msra.mxu0 %v315
      %508 = vmatprep.subr.mxu0 %v318
      %509 = vmatpush1.msra.mxu0 %v317
      %510 = vmatprep.subr.mxu0 %v320
      %511 = vmatpush1.msra.mxu0 %v319
      %512 = vmatprep.subr.mxu0 %v322
      %513 = vmatpush1.msra.mxu0 %v321
      %514 = vmatprep.subr.mxu0 %v324
      %515 = vmatpush1.msra.mxu0 %v323
      %516 = vmatprep.subr.mxu0 %v326
      %517 = vmatpush1.msra.mxu0 %v325
      %518 = vmatprep.subr.mxu0 %v328
      %519 = vmatpush1.msra.mxu0 %v327
      %520 = vmatprep.subr.mxu0 %v330
      %521 = vmatpush1.msra.mxu0 %v329
      %522 = vmatprep.subr.mxu0 %v332
      %523 = vmatpush1.msra.mxu0 %v331
      %524 = vmatprep.subr.mxu0 %v334
      %525 = vmatpush1.msra.mxu0 %v333
      %526 = vmatprep.subr.mxu0 %v336
      %527 = vmatpush1.msra.mxu0 %v335
      %528 = vmatprep.subr.mxu0 %v338
      %529 = vmatpush1.msra.mxu0 %v337
      %530 = vmatprep.subr.mxu0 %v340
      %531 = vmatpush1.msra.mxu0 %v339
      %532 = vmatprep.subr.mxu0 %v342
      %533 = vmatpush1.msra.mxu0 %v341
      %534 = vmatprep.subr.mxu0 %v344
      %535 = vmatpush1.msra.mxu0 %v343
      %536 = vmatprep.subr.mxu0 %v346
      %537 = vmatpush1.msra.mxu0 %v345
      %538 = vmatprep.subr.mxu0 %v348
      %539 = vmatpush1.msra.mxu0 %v347
      %540 = vmatprep.subr.mxu0 %v350
      %541 = vmatpush1.msra.mxu0 %v349
      %542 = vmatprep.subr.mxu0 %v352
      %543 = vmatpush1.msra.mxu0 %v351
      %544 = vmatprep.subr.mxu0 %v354
      %545 = vmatpush1.msra.mxu0 %v353
      %546 = vmatprep.subr.mxu0 %v356
      %547 = vmatpush1.msra.mxu0 %v355
      %548 = vmatprep.subr.mxu0 %v358
      %549 = vmatpush1.msra.mxu0 %v357
      %550 = vmatprep.subr.mxu0 %v360
      %551 = vmatpush1.msra.mxu0 %v359
      %552 = vmatprep.subr.mxu0 %v362
      %553 = vmatpush1.msra.mxu0 %v361
      %554 = vmatprep.subr.mxu0 %v364
      %555 = vmatpush1.msra.mxu0 %v363
      %556 = vmatprep.subr.mxu0 %v366
      %557 = vmatpush1.msra.mxu0 %v365
      %558 = vmatprep.subr.mxu0 %v368
      %559 = vmatpush1.msra.mxu0 %v367
      %560 = vmatprep.subr.mxu0 %v370
      %561 = vmatpush1.msra.mxu0 %v369
      %562 = vmatprep.subr.mxu0 %v372
      %563 = vmatpush1.msra.mxu0 %v371
      %564 = vmatprep.mubr.f32.mxu0 %v233
      %565 = vmatmul.mubr.f32.gmra.mrb[0].mxu0 %v232
      %v566 = vpop.f32.mrb[0].mxu0
      %v567 = vadd.f32 %v484, %v566
      %v568 = vpop.f32.mrb[0].mxu0
      %v569 = vadd.f32 %v486, %v568
      %570 = vmatprep.mubr.f32.mxu0 %v238
      %571 = vmatmul.mubr.f32.gmra.mrb[0].mxu0 %v237
      %v572 = vpop.f32.mrb[0].mxu0
      %v573 = vadd.f32 %v490, %v572
      %v574 = vpop.f32.mrb[0].mxu0
      %v575 = vadd.f32 %v492, %v574
      %576 = vmatprep.mubr.f32.mxu0 %v243
      %577 = vmatmul.mubr.f32.gmra.mrb[0].mxu0 %v242
      %v578 = vpop.f32.mrb[0].mxu0
      %v579 = vadd.f32 %v496, %v578
      %v580 = vpop.f32.mrb[0].mxu0
      %v581 = vadd.f32 %v498, %v580
      %582 = vdwg.mxu0
      %583 = vmatprep.subr.mxu0 %v374
      %584 = vmatpush1.msra.mxu0 %v373
      %585 = vmatprep.subr.mxu0 %v376
      %586 = vmatpush1.msra.mxu0 %v375
      %587 = vmatprep.subr.mxu0 %v378
      %588 = vmatpush1.msra.mxu0 %v377
      %589 = vmatprep.subr.mxu0 %v380
      %590 = vmatpush1.msra.mxu0 %v379
      %591 = vmatprep.subr.mxu0 %v382
      %592 = vmatpush1.msra.mxu0 %v381
      %593 = vmatprep.subr.mxu0 %v384
      %594 = vmatpush1.msra.mxu0 %v383
      %595 = vmatprep.subr.mxu0 %v386
      %596 = vmatpush1.msra.mxu0 %v385
      %597 = vmatprep.subr.mxu0 %v388
      %598 = vmatpush1.msra.mxu0 %v387
      %599 = vmatprep.subr.mxu0 %v390
      %600 = vmatpush1.msra.mxu0 %v389
      %601 = vmatprep.subr.mxu0 %v392
      %602 = vmatpush1.msra.mxu0 %v391
      %603 = vmatprep.subr.mxu0 %v394
      %604 = vmatpush1.msra.mxu0 %v393
      %605 = vmatprep.subr.mxu0 %v396
      %606 = vmatpush1.msra.mxu0 %v395
      %607 = vmatprep.subr.mxu0 %v398
      %608 = vmatpush1.msra.mxu0 %v397
      %609 = vmatprep.subr.mxu0 %v400
      %610 = vmatpush1.msra.mxu0 %v399
      %611 = vmatprep.subr.mxu0 %v402
      %612 = vmatpush1.msra.mxu0 %v401
      %613 = vmatprep.subr.mxu0 %v404
      %614 = vmatpush1.msra.mxu0 %v403
      %615 = vmatprep.subr.mxu0 0.0
      %616 = vmatpush1.msra.mxu0 0.0
      %617 = vmatprep.subr.mxu0 0.0
      %618 = vmatpush1.msra.mxu0 0.0
      %619 = vmatprep.subr.mxu0 0.0
      %620 = vmatpush1.msra.mxu0 0.0
      %621 = vmatprep.subr.mxu0 0.0
      %622 = vmatpush1.msra.mxu0 0.0
      %623 = vmatprep.subr.mxu0 0.0
      %624 = vmatpush1.msra.mxu0 0.0
      %625 = vmatprep.subr.mxu0 0.0
      %626 = vmatpush1.msra.mxu0 0.0
      %627 = vmatprep.subr.mxu0 0.0
      %628 = vmatpush1.msra.mxu0 0.0
      %629 = vmatprep.subr.mxu0 0.0
      %630 = vmatpush1.msra.mxu0 0.0
      %631 = vmatprep.subr.mxu0 0.0
      %632 = vmatpush1.msra.mxu0 0.0
      %633 = vmatprep.subr.mxu0 0.0
      %634 = vmatpush1.msra.mxu0 0.0
      %635 = vmatprep.subr.mxu0 0.0
      %636 = vmatpush1.msra.mxu0 0.0
      %637 = vmatprep.subr.mxu0 0.0
      %638 = vmatpush1.msra.mxu0 0.0
      %639 = vmatprep.subr.mxu0 0.0
      %640 = vmatpush1.msra.mxu0 0.0
      %641 = vmatprep.subr.mxu0 0.0
      %642 = vmatpush1.msra.mxu0 0.0
      %643 = vmatprep.subr.mxu0 0.0
      %644 = vmatpush1.msra.mxu0 0.0
      %645 = vmatprep.subr.mxu0 0.0
      %646 = vmatpush1.msra.mxu0 0.0
      %647 = vmatprep.mubr.f32.mxu0 0.0
      %648 = vmatmul.mubr.f32.gmra.mrb[0].mxu0 %v234
      %v649 = vpop.f32.mrb[0].mxu0
      %v650 = vadd.f32 %v567, %v649
      %v651 = vpop.f32.mrb[0].mxu0
      %v652 = vadd.f32 %v569, %v651
      %653 = vmatprep.mubr.f32.mxu0 0.0
      %654 = vmatmul.mubr.f32.gmra.mrb[0].mxu0 %v239
      %v655 = vpop.f32.mrb[0].mxu0
      %v656 = vadd.f32 %v573, %v655
      %v657 = vpop.f32.mrb[0].mxu0
      %v658 = vadd.f32 %v575, %v657
      %659 = vmatprep.mubr.f32.mxu0 0.0
      %660 = vmatmul.mubr.f32.gmra.mrb[0].mxu0 %v244
      %v661 = vpop.f32.mrb[0].mxu0
      %v662 = vadd.f32 %v579, %v661
      %v663 = vpop.f32.mrb[0].mxu0
      %v664 = vadd.f32 %v581, %v663
      %665 = vdwg.mxu0
      %v666 = vmax.f32 %v650, 0.0
      %v667 = vmax.f32 %v652, 0.0
      %v668 = vmax.f32 %v656, 0.0
      %v669 = vmax.f32 %v658, 0.0
      %v670 = vmax.f32 %v662, 0.0
      %v671 = vmax.f32 %v664, 0.0
      %s672 = sld [smem:[#allocation3 + %s21]]
      %p673 = scmp.gt.s32.totalorder %s672, 0
      %s674 = scalar_select %p673, 1, 0
      %s675 = scvt.s32.f32 %s674
      %v676 = vstv %s675
      %v677 = vmul.f32 %v666, %v676
      %v678 = vmul.f32 %v667, %v676
      %v679 = vadd.f32 %v677, 0.0
      %v680 = vadd.f32 %v678, 0.0
      %p681 = scmp.gt.s32.totalorder %s672, 1
      %s682 = scalar_select %p681, 1, 0
      %s683 = scvt.s32.f32 %s682
      %v684 = vstv %s683
      %v685 = vmul.f32 %v668, %v684
      %v686 = vmul.f32 %v669, %v684
      %v687 = vadd.f32 %v679, %v685
      %v688 = vadd.f32 %v680, %v686
      %p689 = scmp.gt.s32.totalorder %s672, 2
      %s690 = scalar_select %p689, 1, 0
      %s691 = scvt.s32.f32 %s690
      %v692 = vstv %s691
      %v693 = vmul.f32 %v670, %v692
      %v694 = vmul.f32 %v671, %v692
      %v695 = vadd.f32 %v687, %v693
      %v696 = vadd.f32 %v688, %v694
      %697 = vst [vmem:[%s214] sm:$0xff] %v695
      %698 = vst [vmem:[%s214 + $0x8] sm:$0xff] %v696
      %p699 = scmp.lt.s32.totalorder %s21, 3
      %s700 = scalar_select %p699, %s21, 3
      %s701 = smul.addr %s700, 2
      %s702 = smul.addr %s701, 8
      %s703 = scalar_lea.vmem %s4, %s702
      // Predicated region
      $region33: #{relation_module_multiscale_forward.1} parent=31 // pred_check
        %p704 = pneg %p117
      $region34: #{relation_module_multiscale_forward.1} parent=31 // pred_check_branch
        %706 = sbr.rel (%p704) target = $region36
      $region35: #{relation_module_multiscale_forward.1} parent=31 // pred_region
        _
      $region36: #{relation_module_multiscale_forward.1} parent=31 // pred_fallthru
        _
    $region32: #{relation_module_multiscale_forward.1} parent=5 // pred_fallthru
      _
    %p707 = scmp.le.s32.totalorder 2, %s16
    // Predicated region
    $region37: #{relation_module_multiscale_forward.1} parent=5 // pred_check
      %p708 = pneg %p707
    $region38: #{relation_module_multiscale_forward.1} parent=5 // pred_check_branch
      %710 = sbr.rel (%p708) target = $region40
    $region39: #{relation_module_multiscale_forward.1} parent=5 // pred_region
      %s711 = ssub.s32 %s16, 2
      // Predicated region
      $region41: #{relation_module_multiscale_forward.1} parent=39 // pred_check
        %p712 = pneg %p123
      $region42: #{relation_module_multiscale_forward.1} parent=39 // pred_check_branch
        %714 = sbr.rel (%p712) target = $region44
      $region43: #{relation_module_multiscale_forward.1} parent=39 // pred_region
        %p715 = scmp.lt.s32.totalorder %s22, 3
        %s716 = scalar_select %p715, %s22, 3
        %s717 = smul.addr %s716, 2
        %s718 = smul.addr %s717, 8
        %s719 = scalar_lea.vmem %s4, %s718
      $region44: #{relation_module_multiscale_forward.1} parent=39 // pred_fallthru
        _
    $region40: #{relation_module_multiscale_forward.1} parent=5 // pred_fallthru
      _
  $region6: #{relation_module_multiscale_forward.1} parent=0 // loop_footer
    %s20 = sadd.s32 1, %s16
  $region7: #{relation_module_multiscale_forward.1} parent=0 // loop_footer_branch
    %15 = sbr.rel target = $region3
  $region8: #{relation_module_multiscale_forward.1} parent=0 // loop_exit
    _

</llo_original>
